<compile_context>
chip_gen: v6e
topology: v6e:2x2x1
jax: 0.10.0
libtpu: 0.0.40
codegen_flags: <defaults>
</compile_context>

<pallas_src>
import functools

import jax
import jax.numpy as jnp
from jax.experimental import pallas as pl
from jax.experimental.pallas import tpu as pltpu


def _round_up(a, m):
    return ((a + m - 1) // m) * m


def generator1d_kernel(x_ref, slab_ref, out_ref, *, B, C, K1, L):
    """Fused Generator1D forward.

    x_ref    : (B, K1) f32 — input with a constant-1 column (layer-1 bias folded),
               zero-padded to K1 columns.
    slab_ref : (K1 + L + 8, L) f32 packed parameters:
                 rows [0, K1)     layer-1 weight (bias as row `inC`)
                 rows [K1, K1+L)  fused layer-2 weight  [ Wout | Wcritic | 0 ]
                 row  K1+L        fused layer-2 bias    [ bout | bcritic | 0 ]
    out_ref  : (rows, 128) f32 packed outputs:
                 col 0 = log_prob, col 1 = action (float-encoded, exact for small ints),
                 col 2 = criticScore, element [0, 3] = entropy mean.
    """
    x = x_ref[...]                                                   # (B, K1)

    # ---- hidden = ReLU(Linear(inC -> 8*C)), bias folded into the matmul ----
    wh = slab_ref[0:K1, :]                                           # (K1, L)
    mid = jnp.maximum(
        jnp.dot(x, wh, preferred_element_type=jnp.float32), 0.0)     # (B, L)

    # ---- fused second stage: [out | criticScore] in one MXU pass ----
    woc = slab_ref[K1:K1 + L, :]                                     # (L, L)
    boc = slab_ref[K1 + L:K1 + L + 1, :]                             # (1, L)
    fused = jnp.dot(mid, woc, preferred_element_type=jnp.float32) + boc  # (B, L)
    out = fused[:, 0:C]                                              # (B, C)
    critic = fused[:, C:C + 1]                                       # (B, 1)

    # ---- nn.Softmax(dim=0): softmax over the BATCH axis (as in the module) ----
    m0 = jnp.max(out, axis=0, keepdims=True)                         # (1, C)
    e = jnp.exp(out - m0)
    denom0 = jnp.sum(e, axis=0, keepdims=True)                       # (1, C)
    p = e * pl.reciprocal(denom0, approx=True)                       # (B, C)

    # ---- action = argmax(p, dim=1): first maximal index, like torch.argmax ----
    col = jax.lax.broadcasted_iota(jnp.int32, (B, C), 1)
    rowmax = jnp.max(p, axis=1, keepdims=True)
    action = jnp.min(jnp.where(p == rowmax, col, C),
                     axis=1, keepdims=True)                          # (B, 1) int32

    # ---- "if sum(actionDistribution[x]) == 0: += 1e-8" loop, vectorized ----
    rowsum = jnp.sum(p, axis=1, keepdims=True)                       # (B, 1)
    is_zero = rowsum == 0.0
    p_patched = jnp.where(is_zero, p + 1e-8, p)
    denom_row = jnp.where(is_zero, C * 1e-8, rowsum)                 # reuse rowsum

    # ---- Categorical(probs): log_prob(action) and entropy().mean() ----
    pn = p_patched * pl.reciprocal(denom_row, approx=True)           # (B, C) normalized
    log_pn = jnp.log(pn)
    safe_log = jnp.where(pn > 0.0, log_pn, 0.0)   # 0*log(0) -> 0, torch-style
    logp = jnp.sum(jnp.where(col == action, safe_log, 0.0),
                   axis=1, keepdims=True)                            # (B, 1)
    ent_rows = -jnp.sum(pn * safe_log, axis=1, keepdims=True)        # (B, 1)
    ent_mean = jnp.mean(ent_rows).reshape(1, 1)                      # (1, 1)

    # ---- one lane-dense packed output block ----
    out_ref[...] = jnp.zeros_like(out_ref)
    out_ref[0:B, 0:1] = logp
    out_ref[0:B, 1:2] = action.astype(jnp.float32)   # values < 2^24 -> exact in f32
    out_ref[0:B, 2:3] = critic
    out_ref[0:1, 3:4] = ent_mean


def generator1d_forward(x, params):
    B, in_c = x.shape
    assert in_c == params["in_channel"]
    assert B <= 128, "packed output layout assumes batch <= 128"
    C = params["out_channel"]
    K1 = params["k1"]
    L = params["lanes"]

    # Fold the layer-1 bias: append a constant-1 feature, zero-pad to K1 columns.
    ones = jnp.ones((B, 1), jnp.float32)
    pad = jnp.zeros((B, K1 - in_c - 1), jnp.float32)
    x_aug = jnp.concatenate([x.astype(jnp.float32), ones, pad], axis=1)  # (B, K1)

    rows_out = _round_up(B, 8)
    kernel = functools.partial(generator1d_kernel, B=B, C=C, K1=K1, L=L)
    vmem = pl.BlockSpec(memory_space=pltpu.MemorySpace.VMEM)
    packed = pl.pallas_call(
        kernel,
        out_shape=jax.ShapeDtypeStruct((rows_out, 128), jnp.float32),
        in_specs=[vmem, vmem],
        out_specs=vmem,
    )(x_aug, params["slab"])

    log_prob = packed[:B, 0]                   # (B,)
    action = packed[:B, 1].astype(jnp.int32)   # (B,) int32
    critic = packed[:B, 2:3]                   # (B, 1)  == self.criticScore
    entropy_mean = packed[0, 3]                # scalar
    return log_prob, action, entropy_mean, critic


def init_params(key, in_channel, out_channel):
    """Deterministic init mimicking PyTorch Linear default (uniform ±1/sqrt(fan_in)),
    packed into a single (K1+L+8, L) f32 slab with biases folded in as rows."""
    hidden = out_channel * 8
    k1_, k2_, k3_, k4_, k5_, k6_ = jax.random.split(key, 6)

    def lin(kw, kb, fan_in, fan_out):
        bound = 1.0 / jnp.sqrt(jnp.float32(fan_in))
        w = jax.random.uniform(kw, (fan_in, fan_out), jnp.float32, -bound, bound)
        b = jax.random.uniform(kb, (fan_out,), jnp.float32, -bound, bound)
        return w, b

    wh, bh = lin(k1_, k2_, in_channel, hidden)
    wo, bo = lin(k3_, k4_, hidden, out_channel)
    # criticFC is re-created inside forward() in PyTorch; here it is a fixed
    # deterministic parameter set.
    wc, bc = lin(k5_, k6_, hidden, 1)
    # TODO(synk): self.log_std nn.Parameter is defined but unused in forward; not materialized.

    K1 = _round_up(in_channel + 1, 8)            # layer-1 K (with bias row), padded
    N2 = out_channel + 1                         # out cols + critic col
    L = _round_up(max(hidden, N2), 128)          # lane width of the slab
    R = K1 + L + 8

    slab = jnp.zeros((R, L), jnp.float32)
    # Block A: layer-1 weight with bias folded as row `in_channel`
    slab = slab.at[0:in_channel, 0:hidden].set(wh)
    slab = slab.at[in_channel, 0:hidden].set(bh)
    # Block B: fused second-stage weight [Wout | Wcritic | 0]; rows >= hidden stay zero
    slab = slab.at[K1:K1 + hidden, 0:out_channel].set(wo)
    slab = slab.at[K1:K1 + hidden, out_channel].set(wc[:, 0])
    # Block C: fused second-stage bias row [bout | bcritic | 0]
    slab = slab.at[K1 + L, 0:out_channel].set(bo)
    slab = slab.at[K1 + L, out_channel].set(bc[0])

    return {"slab": slab, "in_channel": in_channel, "out_channel": out_channel,
            "hidden": hidden, "k1": K1, "lanes": L}


if __name__ == "__main__":
    key = jax.random.PRNGKey(0)
    k_params, k_x = jax.random.split(key)

    B = 8              # batch
    in_channel = 32    # datainfo.generatorIn
    out_channel = 16   # datainfo.generatorOut  (hidden = 128)

    params = init_params(k_params, in_channel, out_channel)
    x = jax.random.normal(k_x, (B, in_channel), jnp.float32)

    log_prob, action, entropy_mean, critic_score = generator1d_forward(x, params)
    jax.block_until_ready((log_prob, action, entropy_mean, critic_score))

    assert log_prob.shape == (B,)
    assert action.shape == (B,) and action.dtype == jnp.int32
    assert entropy_mean.shape == ()
    assert critic_score.shape == (B, 1)
    print("KERNEL_OK")
</pallas_src>

<mosaic_0001>
module attributes {stable_mosaic.version = 11 : i64} {
  func.func @generator1d_kernel(%arg0: memref<8x40xf32, #tpu.memory_space<vmem>>, %arg1: memref<176x128xf32, #tpu.memory_space<vmem>>, %arg2: memref<8x128xf32, #tpu.memory_space<vmem>>) attributes {dimension_semantics = [], scalar_prefetch = 0 : i64, scratch_operands = 0 : i64, tpu.core_type = #tpu.core_type<tc>} {
    %c0 = arith.constant 0 : index
    %c0_0 = arith.constant 0 : index
    %0 = vector.load %arg0[%c0, %c0_0] : memref<8x40xf32, #tpu.memory_space<vmem>>, vector<8x40xf32>
    %c0_1 = arith.constant 0 : index
    %c0_2 = arith.constant 0 : index
    %1 = vector.load %arg1[%c0_1, %c0_2] : memref<176x128xf32, #tpu.memory_space<vmem>>, vector<40x128xf32>
    %cst = arith.constant dense<0.000000e+00> : vector<8x128xf32>
    %2 = tpu.matmul %0, %1, %cst {dimension_numbers = #tpu.dot_dimension_numbers<[1], [0], [0], [1], [0, 0, 1, 1], [], []>} : vector<8x40xf32>, vector<40x128xf32>, vector<8x128xf32> -> vector<8x128xf32>
    %cst_3 = arith.constant 0.000000e+00 : f32
    %3 = vector.broadcast %cst_3 : f32 to vector<8x128xf32>
    %4 = arith.maximumf %2, %3 : vector<8x128xf32>
    %c40 = arith.constant 40 : index
    %c0_4 = arith.constant 0 : index
    %5 = vector.load %arg1[%c40, %c0_4] : memref<176x128xf32, #tpu.memory_space<vmem>>, vector<128x128xf32>
    %c168 = arith.constant 168 : index
    %c0_5 = arith.constant 0 : index
    %6 = vector.load %arg1[%c168, %c0_5] : memref<176x128xf32, #tpu.memory_space<vmem>>, vector<1x128xf32>
    %cst_6 = arith.constant dense<0.000000e+00> : vector<8x128xf32>
    %7 = tpu.matmul %4, %5, %cst_6 {dimension_numbers = #tpu.dot_dimension_numbers<[1], [0], [0], [1], [0, 0, 1, 1], [], []>} : vector<8x128xf32>, vector<128x128xf32>, vector<8x128xf32> -> vector<8x128xf32>
    %8 = vector.broadcast %6 : vector<1x128xf32> to vector<8x128xf32>
    %9 = arith.addf %7, %8 : vector<8x128xf32>
    %10 = vector.extract_strided_slice %9 {offsets = [0, 0], sizes = [8, 16], strides = [1, 1]} : vector<8x128xf32> to vector<8x16xf32>
    %11 = vector.extract_strided_slice %9 {offsets = [0, 16], sizes = [8, 1], strides = [1, 1]} : vector<8x128xf32> to vector<8x1xf32>
    %cst_7 = arith.constant dense<0xFF800000> : vector<16xf32>
    %12 = vector.multi_reduction <maximumf>, %10, %cst_7 [0] : vector<8x16xf32> to vector<16xf32>
    %13 = vector.shape_cast %12 : vector<16xf32> to vector<1x16xf32>
    %14 = vector.broadcast %13 : vector<1x16xf32> to vector<8x16xf32>
    %15 = arith.subf %10, %14 : vector<8x16xf32>
    %16 = math.exp %15 : vector<8x16xf32>
    %cst_8 = arith.constant dense<0.000000e+00> : vector<16xf32>
    %17 = vector.multi_reduction <add>, %16, %cst_8 [0] : vector<8x16xf32> to vector<16xf32>
    %18 = vector.shape_cast %17 : vector<16xf32> to vector<1x16xf32>
    %19 = tpu.reciprocal %18 {approx = true} : vector<1x16xf32> -> vector<1x16xf32>
    %20 = vector.broadcast %19 : vector<1x16xf32> to vector<8x16xf32>
    %21 = arith.mulf %16, %20 : vector<8x16xf32>
    %22 = tpu.iota {dimensions = array<i32: 1>} : vector<8x16xi32>
    %cst_9 = arith.constant dense<0xFF800000> : vector<8xf32>
    %23 = vector.multi_reduction <maximumf>, %21, %cst_9 [1] : vector<8x16xf32> to vector<8xf32>
    %24 = vector.shape_cast %23 : vector<8xf32> to vector<8x1xf32>
    %25 = vector.broadcast %24 : vector<8x1xf32> to vector<8x16xf32>
    %26 = arith.cmpf oeq, %21, %25 : vector<8x16xf32>
    %c16_i32 = arith.constant 16 : i32
    %27 = vector.broadcast %c16_i32 : i32 to vector<8x16xi32>
    %28 = arith.select %26, %22, %27 : vector<8x16xi1>, vector<8x16xi32>
    %cst_10 = arith.constant dense<2147483647> : vector<8xi32>
    %29 = vector.multi_reduction <minsi>, %28, %cst_10 [1] : vector<8x16xi32> to vector<8xi32>
    %30 = vector.shape_cast %29 : vector<8xi32> to vector<8x1xi32>
    %cst_11 = arith.constant dense<0.000000e+00> : vector<8xf32>
    %31 = vector.multi_reduction <add>, %21, %cst_11 [1] : vector<8x16xf32> to vector<8xf32>
    %32 = vector.shape_cast %31 : vector<8xf32> to vector<8x1xf32>
    %cst_12 = arith.constant 0.000000e+00 : f32
    %33 = vector.broadcast %cst_12 : f32 to vector<8x1xf32>
    %34 = arith.cmpf oeq, %32, %33 : vector<8x1xf32>
    %cst_13 = arith.constant 9.99999993E-9 : f32
    %35 = vector.broadcast %cst_13 : f32 to vector<8x16xf32>
    %36 = arith.addf %21, %35 : vector<8x16xf32>
    %37 = vector.shape_cast %34 : vector<8x1xi1> to vector<8x1xi1>
    %38 = vector.broadcast %37 : vector<8x1xi1> to vector<8x16xi1>
    %39 = arith.select %38, %36, %21 : vector<8x16xi1>, vector<8x16xf32>
    %cst_14 = arith.constant 1.600000e-07 : f32
    %40 = vector.broadcast %cst_14 : f32 to vector<8x1xf32>
    %41 = arith.select %34, %40, %32 : vector<8x1xi1>, vector<8x1xf32>
    %42 = tpu.reciprocal %41 {approx = true} : vector<8x1xf32> -> vector<8x1xf32>
    %43 = vector.broadcast %42 : vector<8x1xf32> to vector<8x16xf32>
    %44 = arith.mulf %39, %43 : vector<8x16xf32>
    %45 = math.log %44 : vector<8x16xf32>
    %cst_15 = arith.constant 0.000000e+00 : f32
    %46 = vector.broadcast %cst_15 : f32 to vector<8x16xf32>
    %47 = arith.cmpf ogt, %44, %46 : vector<8x16xf32>
    %cst_16 = arith.constant 0.000000e+00 : f32
    %48 = vector.broadcast %cst_16 : f32 to vector<8x16xf32>
    %49 = arith.select %47, %45, %48 : vector<8x16xi1>, vector<8x16xf32>
    %50 = vector.broadcast %30 : vector<8x1xi32> to vector<8x16xi32>
    %51 = arith.cmpi eq, %22, %50 : vector<8x16xi32>
    %cst_17 = arith.constant 0.000000e+00 : f32
    %52 = vector.broadcast %cst_17 : f32 to vector<8x16xf32>
    %53 = arith.select %51, %49, %52 : vector<8x16xi1>, vector<8x16xf32>
    %cst_18 = arith.constant dense<0.000000e+00> : vector<8xf32>
    %54 = vector.multi_reduction <add>, %53, %cst_18 [1] : vector<8x16xf32> to vector<8xf32>
    %55 = vector.shape_cast %54 : vector<8xf32> to vector<8x1xf32>
    %56 = arith.mulf %44, %49 : vector<8x16xf32>
    %cst_19 = arith.constant dense<0.000000e+00> : vector<8xf32>
    %57 = vector.multi_reduction <add>, %56, %cst_19 [1] : vector<8x16xf32> to vector<8xf32>
    %58 = vector.shape_cast %57 : vector<8xf32> to vector<8x1xf32>
    %cst_20 = arith.constant 0.000000e+00 : f32
    %59 = vector.broadcast %cst_20 : f32 to vector<8x1xf32>
    %60 = arith.subf %59, %58 : vector<8x1xf32>
    %61 = vector.shape_cast %60 : vector<8x1xf32> to vector<1x8x1xf32>
    %cst_21 = arith.constant dense<0.000000e+00> : vector<1xf32>
    %62 = vector.multi_reduction <add>, %61, %cst_21 [1, 2] : vector<1x8x1xf32> to vector<1xf32>
    %63 = vector.shape_cast %62 : vector<1xf32> to vector<1x1x1xf32>
    %64 = vector.extract %63[0, 0, 0] : f32 from vector<1x1x1xf32>
    %cst_22 = arith.constant 8.000000e+00 : f32
    %65 = arith.divf %64, %cst_22 : f32
    %66 = vector.broadcast %65 : f32 to vector<1x1xf32>
    %cst_23 = arith.constant 0.000000e+00 : f32
    %67 = vector.broadcast %cst_23 : f32 to vector<8x128xf32>
    %c0_24 = arith.constant 0 : index
    %c0_25 = arith.constant 0 : index
    %68 = vector.load %arg2[%c0_24, %c0_25] : memref<8x128xf32, #tpu.memory_space<vmem>>, vector<8x128xf32>
    tpu.vector_store %arg2[%c0_24, %c0_25], %67 {strides = array<i32>} : memref<8x128xf32, #tpu.memory_space<vmem>>, vector<8x128xf32>,
    %c0_26 = arith.constant 0 : index
    %c0_27 = arith.constant 0 : index
    %69 = vector.load %arg2[%c0_26, %c0_27] : memref<8x128xf32, #tpu.memory_space<vmem>>, vector<8x1xf32>
    tpu.vector_store %arg2[%c0_26, %c0_27], %55 {strides = array<i32>} : memref<8x128xf32, #tpu.memory_space<vmem>>, vector<8x1xf32>,
    %70 = arith.sitofp %30 : vector<8x1xi32> to vector<8x1xf32>
    %c0_28 = arith.constant 0 : index
    %c1 = arith.constant 1 : index
    %71 = vector.load %arg2[%c0_28, %c1] : memref<8x128xf32, #tpu.memory_space<vmem>>, vector<8x1xf32>
    tpu.vector_store %arg2[%c0_28, %c1], %70 {strides = array<i32>} : memref<8x128xf32, #tpu.memory_space<vmem>>, vector<8x1xf32>,
    %c0_29 = arith.constant 0 : index
    %c2 = arith.constant 2 : index
    %72 = vector.load %arg2[%c0_29, %c2] : memref<8x128xf32, #tpu.memory_space<vmem>>, vector<8x1xf32>
    tpu.vector_store %arg2[%c0_29, %c2], %11 {strides = array<i32>} : memref<8x128xf32, #tpu.memory_space<vmem>>, vector<8x1xf32>,
    %c0_30 = arith.constant 0 : index
    %c3 = arith.constant 3 : index
    %73 = vector.load %arg2[%c0_30, %c3] : memref<8x128xf32, #tpu.memory_space<vmem>>, vector<1x1xf32>
    tpu.vector_store %arg2[%c0_30, %c3], %66 {strides = array<i32>} : memref<8x128xf32, #tpu.memory_space<vmem>>, vector<1x1xf32>,
    return
  }
}

</mosaic_0001>

<llo_original>
// kernel: tpu_custom_call.1
$region0: #{tpu_custom_call.1}
  #allocation0 [shape = 'u32[]', space=smem, size = 0x4, offset = 0x4, fixed_abs, tag = 'smem constant byte address 0x4 - core index']
  #allocation1 [shape = 'u32[144,128]{1,0:T(1,128)}', space=vmem, size = 0x12000, scoped, tag = 'internal scratch']
  %s0 = inlined_call_operand.hbm [shape: f32[8,40], index: 0, kind: input, shape index: {}]
  %s1 = inlined_call_operand.hbm [shape: f32[176,128], index: 1, kind: input, shape index: {}]
  %s2 = inlined_call_operand.hbm [shape: f32[8,128], index: 2, kind: output, shape index: {}]
  %s3 = sld [smem:[#allocation0]]
  $region26: #{tpu_custom_call.1} parent=0
    _
  %s5 = ssub.s32 1, %s3
  %s6 = scalar_select 0, %s5, %s3
  $region1: #{tpu_custom_call.1} parent=0
    #allocation2 [shape = 'u8[4096]{0}', space=vmem, size = 0x1000, scoped, tag = 'input window, operand 0, single buffered']
    #allocation3 [shape = 's32[1]{0}', space=sflag, size = 0x4, scoped, tag = 'scoped memory for tpu_custom_call.1']
    #allocation4 [shape = 's32[1]{0}', space=sflag, size = 0x4, scoped, tag = 'scoped memory for tpu_custom_call.1']
    #allocation5 [shape = 'u8[90112]{0}', space=vmem, size = 0x16000, scoped, tag = 'input window, operand 1, single buffered']
    #allocation6 [shape = 's32[1]{0}', space=sflag, size = 0x4, scoped, tag = 'scoped memory for tpu_custom_call.1']
    #allocation7 [shape = 'u8[4096]{0}', space=vmem, size = 0x1000, scoped, tag = 'output window, operand 0, single buffered']
    %7 = vsyncpa [#allocation3], 0
    %8 = vsyncpa [#allocation6], 0
    %9 = vsyncpa [#allocation4], 0
    // Predicated region
    $region2: #{tpu_custom_call.1} parent=1 // pred_check
      _
    $region3: #{tpu_custom_call.1} parent=1 // pred_check_branch
      %11 = sbr.rel (0) target = $region5
    $region4: #{tpu_custom_call.1} parent=1 // pred_region
      %s13 = ssub.s32 128, 128
      %14 = vsyncadd [#allocation3], %s13
      %s16 = sshll.u32 [#allocation2], 4
      %s17 = int_to_ptr.vmem [resolvable:$true] %s16
      %19 = dma.hbm_to_vmem [thread:$0]  %s0, 128, %s17, [#allocation3]
    $region5: #{tpu_custom_call.1} parent=1 // pred_fallthru
      _
    // Predicated region
    $region6: #{tpu_custom_call.1} parent=1 // pred_check
      _
    $region7: #{tpu_custom_call.1} parent=1 // pred_check_branch
      %21 = sbr.rel (0) target = $region9
    $region8: #{tpu_custom_call.1} parent=1 // pred_region
      %s23 = ssub.s32 2816, 2816
      %24 = vsyncadd [#allocation6], %s23
      %s25 = sshll.u32 [#allocation5], 4
      %s26 = int_to_ptr.vmem [resolvable:$true] %s25
      %31 = dma.hbm_to_vmem [thread:$0]  %s1, 2816, %s26, [#allocation6], 128, 128, 8
    $region9: #{tpu_custom_call.1} parent=1 // pred_fallthru
      _
    // Predicated region
    $region10: #{tpu_custom_call.1} parent=1 // pred_check
      _
    $region11: #{tpu_custom_call.1} parent=1 // pred_check_branch
      %33 = sbr.rel (0) target = $region13
    $region12: #{tpu_custom_call.1} parent=1 // pred_region
      %34 = dma.done [#allocation3], 128
    $region13: #{tpu_custom_call.1} parent=1 // pred_fallthru
      _
    // Predicated region
    $region14: #{tpu_custom_call.1} parent=1 // pred_check
      _
    $region15: #{tpu_custom_call.1} parent=1 // pred_check_branch
      %36 = sbr.rel (0) target = $region17
    $region16: #{tpu_custom_call.1} parent=1 // pred_region
      %37 = dma.done [#allocation6], 2816
    $region17: #{tpu_custom_call.1} parent=1 // pred_fallthru
      _
    %v38 = vld [vmem:[#allocation2] sm:$0xff]
    %v39 = vld [vmem:[#allocation5] sm:$0xff]
    %v40 = vld [vmem:[#allocation5 + $0x8] sm:$0xff]
    %v41 = vld [vmem:[#allocation5 + $0x10] sm:$0xff]
    %v42 = vld [vmem:[#allocation5 + $0x18] sm:$0xff]
    %v43 = vld [vmem:[#allocation5 + $0x20] sm:$0xff]
    %vm44 = vcmask 326656
    %v46 = vsel %vm44, %v38, 0
    %48 = vmatprep.subr.mxu0 0.0
    %49 = vmatpush1.msra.mxu0 0.0
    %50 = vmatprep.subr.mxu0 0.0
    %51 = vmatpush1.msra.mxu0 0.0
    %52 = vmatprep.subr.mxu0 0.0
    %53 = vmatpush1.msra.mxu0 0.0
    %54 = vmatprep.subr.mxu0 0.0
    %55 = vmatpush1.msra.mxu0 0.0
    %56 = vmatprep.subr.mxu0 0.0
    %57 = vmatpush1.msra.mxu0 0.0
    %58 = vmatprep.subr.mxu0 0.0
    %59 = vmatpush1.msra.mxu0 0.0
    %60 = vmatprep.subr.mxu0 0.0
    %61 = vmatpush1.msra.mxu0 0.0
    %62 = vmatprep.subr.mxu0 0.0
    %63 = vmatpush1.msra.mxu0 0.0
    %64 = vmatprep.subr.mxu0 0.0
    %65 = vmatpush1.msra.mxu0 0.0
    %66 = vmatprep.subr.mxu0 0.0
    %67 = vmatpush1.msra.mxu0 0.0
    %68 = vmatprep.subr.mxu0 0.0
    %69 = vmatpush1.msra.mxu0 0.0
    %70 = vmatprep.subr.mxu0 0.0
    %71 = vmatpush1.msra.mxu0 %v43
    %72 = vmatprep.subr.mxu0 0.0
    %73 = vmatpush1.msra.mxu0 %v42
    %74 = vmatprep.subr.mxu0 0.0
    %75 = vmatpush1.msra.mxu0 %v41
    %76 = vmatprep.subr.mxu0 0.0
    %77 = vmatpush1.msra.mxu0 %v40
    %78 = vmatprep.subr.mxu0 0.0
    %79 = vmatpush1.msra.mxu0 %v39
    %80 = vmatprep.subr.mxu0 0.0
    %81 = vmatpush2.msra.mxu0 0.0
    %82 = vmatprep.subr.mxu0 0.0
    %83 = vmatpush2.msra.mxu0 0.0
    %84 = vmatprep.subr.mxu0 0.0
    %85 = vmatpush2.msra.mxu0 0.0
    %86 = vmatprep.subr.mxu0 0.0
    %87 = vmatpush2.msra.mxu0 0.0
    %88 = vmatprep.subr.mxu0 0.0
    %89 = vmatpush2.msra.mxu0 0.0
    %90 = vmatprep.subr.mxu0 0.0
    %91 = vmatpush2.msra.mxu0 0.0
    %92 = vmatprep.subr.mxu0 0.0
    %93 = vmatpush2.msra.mxu0 0.0
    %94 = vmatprep.subr.mxu0 0.0
    %95 = vmatpush2.msra.mxu0 0.0
    %96 = vmatprep.subr.mxu0 0.0
    %97 = vmatpush2.msra.mxu0 0.0
    %98 = vmatprep.subr.mxu0 0.0
    %99 = vmatpush2.msra.mxu0 0.0
    %100 = vmatprep.subr.mxu0 0.0
    %101 = vmatpush2.msra.mxu0 0.0
    %102 = vmatprep.subr.mxu0 0.0
    %103 = vmatpush2.msra.mxu0 0.0
    %104 = vmatprep.subr.mxu0 0.0
    %105 = vmatpush2.msra.mxu0 0.0
    %106 = vmatprep.subr.mxu0 0.0
    %107 = vmatpush2.msra.mxu0 0.0
    %108 = vmatprep.subr.mxu0 0.0
    %109 = vmatpush2.msra.mxu0 0.0
    %110 = vmatprep.subr.mxu0 0.0
    %111 = vmatpush2.msra.mxu0 0.0
    %112 = vmatprep.mubr.f32.mxu0 0.0
    %113 = vmatmul.mubr.f32.gmra.mxu0 %v46
    %v114 = vpop.f32.mrf.mxu0
    %v115 = vadd.f32 0.0, %v114
    %v116 = vpop.f32.mrf.mxu0
    %117 = vdwg.mxu0
    %v118 = vmax.f32 %v115, 0.0
    %v119 = vld [vmem:[#allocation5 + $0x28] sm:$0xff]
    %v120 = vld [vmem:[#allocation5 + $0x30] sm:$0xff]
    %v121 = vld [vmem:[#allocation5 + $0x38] sm:$0xff]
    %v122 = vld [vmem:[#allocation5 + $0x40] sm:$0xff]
    %v123 = vld [vmem:[#allocation5 + $0x48] sm:$0xff]
    %v124 = vld [vmem:[#allocation5 + $0x50] sm:$0xff]
    %v125 = vld [vmem:[#allocation5 + $0x58] sm:$0xff]
    %v126 = vld [vmem:[#allocation5 + $0x60] sm:$0xff]
    %v127 = vld [vmem:[#allocation5 + $0x68] sm:$0xff]
    %v128 = vld [vmem:[#allocation5 + $0x70] sm:$0xff]
    %v129 = vld [vmem:[#allocation5 + $0x78] sm:$0xff]
    %v130 = vld [vmem:[#allocation5 + $0x80] sm:$0xff]
    %v131 = vld [vmem:[#allocation5 + $0x88] sm:$0xff]
    %v132 = vld [vmem:[#allocation5 + $0x90] sm:$0xff]
    %v133 = vld [vmem:[#allocation5 + $0x98] sm:$0xff]
    %v134 = vld [vmem:[#allocation5 + $0xa0] sm:$0xff]
    %v135 = vld [vmem:[#allocation5 + $0xa8] sm:$0x1]
    %v136 = vlaneseq
    %v137 = vshrl.u32 %v136, 7
    %v138 = vsub.s32 0, %v137
    %v139 = vrot.slane %v135, %v138
    %140 = vmatprep.subr.mxu0 0.0
    %141 = vmatpush1.msra.mxu0 %v134
    %142 = vmatprep.subr.mxu0 0.0
    %143 = vmatpush1.msra.mxu0 %v133
    %144 = vmatprep.subr.mxu0 0.0
    %145 = vmatpush1.msra.mxu0 %v132
    %146 = vmatprep.subr.mxu0 0.0
    %147 = vmatpush1.msra.mxu0 %v131
    %148 = vmatprep.subr.mxu0 0.0
    %149 = vmatpush1.msra.mxu0 %v130
    %150 = vmatprep.subr.mxu0 0.0
    %151 = vmatpush1.msra.mxu0 %v129
    %152 = vmatprep.subr.mxu0 0.0
    %153 = vmatpush1.msra.mxu0 %v128
    %154 = vmatprep.subr.mxu0 0.0
    %155 = vmatpush1.msra.mxu0 %v127
    %156 = vmatprep.subr.mxu0 0.0
    %157 = vmatpush1.msra.mxu0 %v126
    %158 = vmatprep.subr.mxu0 0.0
    %159 = vmatpush1.msra.mxu0 %v125
    %160 = vmatprep.subr.mxu0 0.0
    %161 = vmatpush1.msra.mxu0 %v124
    %162 = vmatprep.subr.mxu0 0.0
    %163 = vmatpush1.msra.mxu0 %v123
    %164 = vmatprep.subr.mxu0 0.0
    %165 = vmatpush1.msra.mxu0 %v122
    %166 = vmatprep.subr.mxu0 0.0
    %167 = vmatpush1.msra.mxu0 %v121
    %168 = vmatprep.subr.mxu0 0.0
    %169 = vmatpush1.msra.mxu0 %v120
    %170 = vmatprep.subr.mxu0 0.0
    %171 = vmatpush1.msra.mxu0 %v119
    %172 = vmatprep.subr.mxu0 0.0
    %173 = vmatpush2.msra.mxu0 0.0
    %174 = vmatprep.subr.mxu0 0.0
    %175 = vmatpush2.msra.mxu0 0.0
    %176 = vmatprep.subr.mxu0 0.0
    %177 = vmatpush2.msra.mxu0 0.0
    %178 = vmatprep.subr.mxu0 0.0
    %179 = vmatpush2.msra.mxu0 0.0
    %180 = vmatprep.subr.mxu0 0.0
    %181 = vmatpush2.msra.mxu0 0.0
    %182 = vmatprep.subr.mxu0 0.0
    %183 = vmatpush2.msra.mxu0 0.0
    %184 = vmatprep.subr.mxu0 0.0
    %185 = vmatpush2.msra.mxu0 0.0
    %186 = vmatprep.subr.mxu0 0.0
    %187 = vmatpush2.msra.mxu0 0.0
    %188 = vmatprep.subr.mxu0 0.0
    %189 = vmatpush2.msra.mxu0 0.0
    %190 = vmatprep.subr.mxu0 0.0
    %191 = vmatpush2.msra.mxu0 0.0
    %192 = vmatprep.subr.mxu0 0.0
    %193 = vmatpush2.msra.mxu0 0.0
    %194 = vmatprep.subr.mxu0 0.0
    %195 = vmatpush2.msra.mxu0 0.0
    %196 = vmatprep.subr.mxu0 0.0
    %197 = vmatpush2.msra.mxu0 0.0
    %198 = vmatprep.subr.mxu0 0.0
    %199 = vmatpush2.msra.mxu0 0.0
    %200 = vmatprep.subr.mxu0 0.0
    %201 = vmatpush2.msra.mxu0 0.0
    %202 = vmatprep.subr.mxu0 0.0
    %203 = vmatpush2.msra.mxu0 0.0
    %204 = vmatprep.mubr.f32.mxu0 0.0
    %205 = vmatmul.mubr.f32.gmra.mxu0 %v118
    %v206 = vpop.f32.mrf.mxu0
    %v207 = vadd.f32 %v139, %v206
    %v208 = vpop.f32.mrf.mxu0
    %209 = vdwg.mxu0
    %vm210 = vcmask 130048
    %v211 = vsel %vm210, %v207, -inf
    %v212 = vrot.slane %v211, 4
    %v213 = vmax.f32 %v211, %v212
    %v214 = vrot.slane %v213, 2
    %v215 = vmax.f32 %v213, %v214
    %v216 = vrot.slane %v215, 1
    %v217 = vmax.f32 %v215, %v216
    %v218 = vsub.f32 %v207, %v217
    %v219 = vmul.f32 %v218, 1.442695
    %v220 = vpow.pop %v219
    %v221 = vsel %vm210, %v220, 0.0
    %v222 = vrot.slane %v221, 4
    %v223 = vadd.f32 %v221, %v222
    %v224 = vrot.slane %v223, 2
    %v225 = vadd.f32 %v223, %v224
    %v226 = vrot.slane %v225, 1
    %v227 = vadd.f32 %v225, %v226
    %v228 = vrcp.pop %v227
    %v229 = vmul.f32 %v220, %v228
    %v230 = vlaneseq
    %v231 = vand.u32 %v230, 127
    %v232 = vsel %vm210, %v229, -inf
    %233 = vmax.xlane.f32.xlu0 %v232
    %v234 = vpop.xlane.xlu0 %233
    %vm235 = vcmp.eq.f32.partialorder %v229, %v234
    %v236 = vsel %vm235, %v231, 16
    %v237 = vsel %vm210, %v236, 2147483647
    %v238 = vand.u32 %v237, 65535
    %v239 = vshra.s32 %v237, 16
    %v240 = vcvt.s32.f32 %v238
    %v241 = vcvt.s32.f32 %v239
    %242 = vmin.xlane.f32.xlu0 %v241
    %v243 = vpop.xlane.xlu0 %242
    %vm244 = vcmp.eq.f32.partialorder %v241, %v243
    %v245 = vsel %vm244, %v240, inf
    %246 = vmin.xlane.f32.xlu0 %v245
    %v247 = vpop.xlane.xlu0 %246
    %v248 = vcvt.f32.s32 %v247
    %v249 = vcvt.f32.s32 %v243
    %v250 = vshll.u32 %v249, 16
    %v251 = vadd.s32 %v250, %v248
    %v252 = vsel %vm210, %v229, 0.0
    %253 = vadd.xlane.f32.xlu0 %v252
    %v254 = vpop.xlane.xlu0 %253
    %vm255 = vcmp.eq.f32.partialorder %v254, 0.0
    %v256 = vadd.f32 %v229, 1e-08
    %v257 = vsel %vm255, 1, 0
    %vm258 = vcmp.eq.s32.totalorder %v257, 1
    %v259 = vsel %vm258, %v256, %v229
    %v260 = vsel %vm255, 1.6e-07, %v254
    %v261 = vrcp.pop %v260
    %v262 = vmul.f32 %v259, %v261
    %v263 = vlog2.pop %v262
    %v264 = vmul.f32 %v263, 0.6931472
    %vm265 = vcmp.gt.f32.partialorder %v262, 0.0
    %v266 = vsel %vm265, %v264, 0.0
    %vm267 = vcmp.eq.s32.totalorder %v231, %v251
    %v268 = vsel %vm267, %v266, 0.0
    %v269 = vsel %vm210, %v268, 0.0
    %270 = vadd.xlane.f32.xlu0 %v269
    %v271 = vpop.xlane.xlu0 %270
    %v272 = vmul.f32 %v262, %v266
    %v273 = vsel %vm210, %v272, 0.0
    %274 = vadd.xlane.f32.xlu0 %v273
    %v275 = vpop.xlane.xlu0 %274
    %v276 = vsub.f32 0.0, %v275
    %vm277 = vcmask 7168
    %v278 = vsel %vm277, %v276, 0.0
    %279 = vadd.xlane.f32.xlu0 %v278
    %v280 = vpop.xlane.xlu0 %279
    %v281 = vrot.slane %v280, 4
    %v282 = vadd.f32 %v280, %v281
    %v283 = vrot.slane %v282, 2
    %v284 = vadd.f32 %v282, %v283
    %v285 = vrot.slane %v284, 1
    %v286 = vadd.f32 %v284, %v285
    %s287 = vtos %v286
    %v288 = vrcp.pop 8.0
    %s289 = vtos %v288
    %s290 = smul.f32 %s287, %s289
    %v291 = vstv %s290
    %292 = vst [vmem:[#allocation7] sm:$0xff] 0.0
    %293 = vst.msk [vmem:[#allocation7] sm:$0xff] %vm277, %v271
    %v294 = vcvt.s32.f32 %v251
    %vm295 = vcmask 15368
    %296 = vst.msk [vmem:[#allocation7] sm:$0xff] %vm295, %v294
    %298 = vrot.lane.b32.xlu0 %v207, 114
    %v299 = vpop.permute.xlu0 %298
    %vm301 = vcmask 23568
    %302 = vst.msk [vmem:[#allocation7] sm:$0xff] %vm301, %v299
    %vm303 = vcmask 24600
    %304 = vst.msk [vmem:[#allocation7] sm:$0x1] %vm303, %v291
    // Predicated region
    $region18: #{tpu_custom_call.1} parent=1 // pred_check
      _
    $region19: #{tpu_custom_call.1} parent=1 // pred_check_branch
      %306 = sbr.rel (0) target = $region21
    $region20: #{tpu_custom_call.1} parent=1 // pred_region
      %s308 = ssub.s32 128, 128
      %309 = vsyncadd [#allocation4], %s308
      %s311 = sshll.u32 [#allocation7], 4
      %s312 = int_to_ptr.vmem [resolvable:$true] %s311
      %314 = dma.vmem_to_hbm [thread:$0]  %s312, 128, %s2, [#allocation4]
    $region21: #{tpu_custom_call.1} parent=1 // pred_fallthru
      _
    // Predicated region
    $region22: #{tpu_custom_call.1} parent=1 // pred_check
      _
    $region23: #{tpu_custom_call.1} parent=1 // pred_check_branch
      %316 = sbr.rel (0) target = $region25
    $region24: #{tpu_custom_call.1} parent=1 // pred_region
      %317 = dma.done [#allocation4], 128
    $region25: #{tpu_custom_call.1} parent=1 // pred_fallthru
      _
    %318 = vsyncpa [#allocation3], 1
    %319 = vsyncpa [#allocation6], 1
    %320 = vsyncpa [#allocation4], 1

</llo_original>
